<compile_context>
chip_gen: v7x
topology: tpu7x:2x2x1
jax: 0.10.0
libtpu: 0.0.40
codegen_flags: <defaults>
</compile_context>

<pallas_src>
import functools

import jax
import jax.numpy as jnp
from jax.experimental import pallas as pl
from jax.experimental.pallas import tpu as pltpu


def _vpu_matmul(w, x, acc=None):
    """(M, K) @ (K, N) as K unrolled broadcast multiply-adds on the VPU.

    Used for the layers where K or M is tiny (4 or 2): an MXU matmul there is
    <2% array occupancy and almost pure fill/drain latency.
    """
    k0 = 0
    if acc is None:
        acc = w[:, 0:1] * x[0:1, :]
        k0 = 1
    for k in range(k0, w.shape[1]):
        acc = acc + w[:, k:k + 1] * x[k:k + 1, :]
    return acc


def _mlp_kernel(x_ref, w1_ref, b1_ref, w2_ref, b2_ref, w3_ref, o_ref):
    # x_ref: (D_in, tb) with batch on the lane axis; weights torch-native (out, in);
    # biases (out, 1). All activations are (features, tb) -> lane-dense vregs/stores.
    x = x_ref[...]

    # layer 1: K = D_in (tiny) -> VPU outer-product accumulation, bias as initial acc.
    h = jnp.tanh(_vpu_matmul(w1_ref[...], x, acc=b1_ref[...]))

    # layer 2: the only real matmul (H x H) @ (H, tb) -> MXU with f32 accumulate.
    h = jnp.tanh(
        jnp.dot(w2_ref[...], h, preferred_element_type=jnp.float32) + b2_ref[...])

    # layer 3: only D_out output rows (no bias) -> VPU unroll again, skip the MXU.
    o_ref[...] = _vpu_matmul(w3_ref[...], h)


def _round_up(x, m):
    return ((x + m - 1) // m) * m


@functools.partial(jax.jit, static_argnames=("max_batch_tile", "single_step_rows"))
def base_nn_forward(x, w1, b1, w2, b2, w3, *, max_batch_tile=8192,
                    single_step_rows=2048):
    """x: (B, D_in); w1: (H, D_in); b1: (H, 1); w2: (H, H); b2: (H, 1); w3: (D_out, H).

    Returns (B, D_out), matching BaseNN.forward semantics.
    """
    assert max_batch_tile % 128 == 0, "batch tile must be a multiple of 128 lanes"
    B, D_in = x.shape
    H = w1.shape[0]
    D_out = w3.shape[0]

    # Batch-on-lanes: the (B, 4) -> (4, B) transpose is a cheap, narrow pass and buys
    # lane-dense activations and an unmasked lane-dense output store inside the kernel.
    x_t = x.T  # (D_in, B)

    if B <= single_step_rows:
        # One full-array block (exempt from the (8,128) rule); splitting an
        # overhead-bound launch across cores would be pure overhead.
        tb = B
    else:
        # Big tiles amortize per-step overhead; cap so >=2 grid steps exist and
        # v7x's two TensorCores both get work. VMEM stays tiny either way
        # (tb=8192 -> ~1.3 MiB live, far under the 32 MiB scoped budget).
        tb = min(max_batch_tile, _round_up(pl.cdiv(B, 2), 128))
    grid = (pl.cdiv(B, tb),)  # ragged last block: OOB reads/writes masked by Pallas

    const2d = lambda shape: pl.BlockSpec(shape, lambda i: (0, 0))  # VMEM-resident

    out_t = pl.pallas_call(
        _mlp_kernel,
        out_shape=jax.ShapeDtypeStruct((D_out, B), jnp.float32),
        grid=grid,
        in_specs=[
            pl.BlockSpec((D_in, tb), lambda i: (0, i)),  # x_t: streamed per batch tile
            const2d((H, D_in)),                          # w1 (resident)
            const2d((H, 1)),                             # b1 (resident)
            const2d((H, H)),                             # w2 (resident)
            const2d((H, 1)),                             # b2 (resident)
            const2d((D_out, H)),                         # w3 (resident)
        ],
        out_specs=pl.BlockSpec((D_out, tb), lambda i: (0, i)),
        compiler_params=pltpu.CompilerParams(
            # independent batch tiles -> let v7x's 2 TensorCores split the grid
            dimension_semantics=("parallel",),
            # conservative budget valid on v5e/v6e/v7x (v7x physical VMEM is 64 MiB)
            vmem_limit_bytes=32 << 20,
        ),
    )(x_t, w1, b1, w2, b2, w3)

    return out_t.T  # (B, D_out)


def make_params(key, input_dim, hidden_dim, output_dim, baseline=True):
    """Deterministic params mirroring BaseNN.__init__ (orthogonal weights, torch-native layout)."""
    if not baseline:
        input_dim = input_dim + 1
    k1, k2, k3, kb1, kb2 = jax.random.split(key, 5)
    ortho = jax.nn.initializers.orthogonal()
    w1 = ortho(k1, (hidden_dim, input_dim), jnp.float32)   # (H, D_in)
    w2 = ortho(k2, (hidden_dim, hidden_dim), jnp.float32)  # (H, H)
    w3 = ortho(k3, (output_dim, hidden_dim), jnp.float32)  # (D_out, H), no bias
    # torch default bias init: U(-1/sqrt(fan_in), 1/sqrt(fan_in)); stored as (H, 1) columns.
    b1 = jax.random.uniform(kb1, (hidden_dim, 1), jnp.float32,
                            -1.0 / jnp.sqrt(input_dim), 1.0 / jnp.sqrt(input_dim))
    b2 = jax.random.uniform(kb2, (hidden_dim, 1), jnp.float32,
                            -1.0 / jnp.sqrt(hidden_dim), 1.0 / jnp.sqrt(hidden_dim))
    return w1, b1, w2, b2, w3


def reference_forward(x, w1, b1, w2, b2, w3):
    h = jnp.tanh(x @ w1.T + b1[:, 0])
    h = jnp.tanh(h @ w2.T + b2[:, 0])
    return h @ w3.T


if __name__ == "__main__":
    key = jax.random.PRNGKey(0)
    kp, kx1, kx2, kx3 = jax.random.split(key, 4)

    input_dim, hidden_dim, output_dim = 4, 32, 2
    params = make_params(kp, input_dim, hidden_dim, output_dim, baseline=True)

    # tiny batch / single-block batch / multi-step grid with a ragged last tile
    for kx, batch in ((kx1, 2), (kx2, 512), (kx3, 2500)):
        x = jax.random.normal(kx, (batch, input_dim), jnp.float32)
        out = jax.block_until_ready(base_nn_forward(x, *params))
        ref = reference_forward(x, *params)
        assert out.shape == (batch, output_dim)
        err = float(jnp.max(jnp.abs(out - ref)))
        assert jnp.allclose(out, ref, atol=1e-5, rtol=1e-5), (batch, err)

    print("KERNEL_OK")
</pallas_src>

<mosaic_0001>
module attributes {stable_mosaic.version = 11 : i64} {
  func.func @_mlp_kernel(%arg0: i32, %arg1: memref<4x2xf32, #tpu.memory_space<vmem>>, %arg2: memref<32x4xf32, #tpu.memory_space<vmem>>, %arg3: memref<32x1xf32, #tpu.memory_space<vmem>>, %arg4: memref<32x32xf32, #tpu.memory_space<vmem>>, %arg5: memref<32x1xf32, #tpu.memory_space<vmem>>, %arg6: memref<2x32xf32, #tpu.memory_space<vmem>>, %arg7: memref<2x2xf32, #tpu.memory_space<vmem>>) attributes {dimension_semantics = [#tpu.dimension_semantics<parallel>], iteration_bounds = array<i64: 1>, scalar_prefetch = 0 : i64, scratch_operands = 0 : i64, tpu.core_type = #tpu.core_type<tc>, window_params = [{transform_indices = @transform_0, window_bounds = array<i64: 4, 2>}, {pipeline_mode = #tpu.pipeline_mode<synchronous>, transform_indices = @transform_1, window_bounds = array<i64: 32, 4>}, {pipeline_mode = #tpu.pipeline_mode<synchronous>, transform_indices = @transform_2, window_bounds = array<i64: 32, 1>}, {pipeline_mode = #tpu.pipeline_mode<synchronous>, transform_indices = @transform_3, window_bounds = array<i64: 32, 32>}, {pipeline_mode = #tpu.pipeline_mode<synchronous>, transform_indices = @transform_4, window_bounds = array<i64: 32, 1>}, {pipeline_mode = #tpu.pipeline_mode<synchronous>, transform_indices = @transform_5, window_bounds = array<i64: 2, 32>}, {transform_indices = @transform_6, window_bounds = array<i64: 2, 2>}]} {
    %c0 = arith.constant 0 : index
    %c0_0 = arith.constant 0 : index
    %0 = vector.load %arg1[%c0, %c0_0] : memref<4x2xf32, #tpu.memory_space<vmem>>, vector<4x2xf32>
    %c0_1 = arith.constant 0 : index
    %c0_2 = arith.constant 0 : index
    %1 = vector.load %arg2[%c0_1, %c0_2] : memref<32x4xf32, #tpu.memory_space<vmem>>, vector<32x4xf32>
    %c0_3 = arith.constant 0 : index
    %c0_4 = arith.constant 0 : index
    %2 = vector.load %arg3[%c0_3, %c0_4] : memref<32x1xf32, #tpu.memory_space<vmem>>, vector<32x1xf32>
    %3 = vector.extract_strided_slice %1 {offsets = [0, 0], sizes = [32, 1], strides = [1, 1]} : vector<32x4xf32> to vector<32x1xf32>
    %4 = vector.extract_strided_slice %0 {offsets = [0, 0], sizes = [1, 2], strides = [1, 1]} : vector<4x2xf32> to vector<1x2xf32>
    %5 = vector.broadcast %3 : vector<32x1xf32> to vector<32x2xf32>
    %6 = vector.broadcast %4 : vector<1x2xf32> to vector<32x2xf32>
    %7 = arith.mulf %5, %6 : vector<32x2xf32>
    %8 = vector.broadcast %2 : vector<32x1xf32> to vector<32x2xf32>
    %9 = arith.addf %8, %7 : vector<32x2xf32>
    %10 = vector.extract_strided_slice %1 {offsets = [0, 1], sizes = [32, 1], strides = [1, 1]} : vector<32x4xf32> to vector<32x1xf32>
    %11 = vector.extract_strided_slice %0 {offsets = [1, 0], sizes = [1, 2], strides = [1, 1]} : vector<4x2xf32> to vector<1x2xf32>
    %12 = vector.broadcast %10 : vector<32x1xf32> to vector<32x2xf32>
    %13 = vector.broadcast %11 : vector<1x2xf32> to vector<32x2xf32>
    %14 = arith.mulf %12, %13 : vector<32x2xf32>
    %15 = arith.addf %9, %14 : vector<32x2xf32>
    %16 = vector.extract_strided_slice %1 {offsets = [0, 2], sizes = [32, 1], strides = [1, 1]} : vector<32x4xf32> to vector<32x1xf32>
    %17 = vector.extract_strided_slice %0 {offsets = [2, 0], sizes = [1, 2], strides = [1, 1]} : vector<4x2xf32> to vector<1x2xf32>
    %18 = vector.broadcast %16 : vector<32x1xf32> to vector<32x2xf32>
    %19 = vector.broadcast %17 : vector<1x2xf32> to vector<32x2xf32>
    %20 = arith.mulf %18, %19 : vector<32x2xf32>
    %21 = arith.addf %15, %20 : vector<32x2xf32>
    %22 = vector.extract_strided_slice %1 {offsets = [0, 3], sizes = [32, 1], strides = [1, 1]} : vector<32x4xf32> to vector<32x1xf32>
    %23 = vector.extract_strided_slice %0 {offsets = [3, 0], sizes = [1, 2], strides = [1, 1]} : vector<4x2xf32> to vector<1x2xf32>
    %24 = vector.broadcast %22 : vector<32x1xf32> to vector<32x2xf32>
    %25 = vector.broadcast %23 : vector<1x2xf32> to vector<32x2xf32>
    %26 = arith.mulf %24, %25 : vector<32x2xf32>
    %27 = arith.addf %21, %26 : vector<32x2xf32>
    %28 = math.tanh %27 : vector<32x2xf32>
    %c0_5 = arith.constant 0 : index
    %c0_6 = arith.constant 0 : index
    %29 = vector.load %arg4[%c0_5, %c0_6] : memref<32x32xf32, #tpu.memory_space<vmem>>, vector<32x32xf32>
    %cst = arith.constant dense<0.000000e+00> : vector<32x2xf32>
    %30 = tpu.matmul %29, %28, %cst {dimension_numbers = #tpu.dot_dimension_numbers<[1], [0], [0], [1], [0, 0, 1, 1], [], []>} : vector<32x32xf32>, vector<32x2xf32>, vector<32x2xf32> -> vector<32x2xf32>
    %c0_7 = arith.constant 0 : index
    %c0_8 = arith.constant 0 : index
    %31 = vector.load %arg5[%c0_7, %c0_8] : memref<32x1xf32, #tpu.memory_space<vmem>>, vector<32x1xf32>
    %32 = vector.broadcast %31 : vector<32x1xf32> to vector<32x2xf32>
    %33 = arith.addf %30, %32 : vector<32x2xf32>
    %34 = math.tanh %33 : vector<32x2xf32>
    %c0_9 = arith.constant 0 : index
    %c0_10 = arith.constant 0 : index
    %35 = vector.load %arg6[%c0_9, %c0_10] : memref<2x32xf32, #tpu.memory_space<vmem>>, vector<2x32xf32>
    %36 = vector.extract_strided_slice %35 {offsets = [0, 0], sizes = [2, 1], strides = [1, 1]} : vector<2x32xf32> to vector<2x1xf32>
    %37 = vector.extract_strided_slice %34 {offsets = [0, 0], sizes = [1, 2], strides = [1, 1]} : vector<32x2xf32> to vector<1x2xf32>
    %38 = vector.broadcast %36 : vector<2x1xf32> to vector<2x2xf32>
    %39 = vector.broadcast %37 : vector<1x2xf32> to vector<2x2xf32>
    %40 = arith.mulf %38, %39 : vector<2x2xf32>
    %41 = vector.extract_strided_slice %35 {offsets = [0, 1], sizes = [2, 1], strides = [1, 1]} : vector<2x32xf32> to vector<2x1xf32>
    %42 = vector.extract_strided_slice %34 {offsets = [1, 0], sizes = [1, 2], strides = [1, 1]} : vector<32x2xf32> to vector<1x2xf32>
    %43 = vector.broadcast %41 : vector<2x1xf32> to vector<2x2xf32>
    %44 = vector.broadcast %42 : vector<1x2xf32> to vector<2x2xf32>
    %45 = arith.mulf %43, %44 : vector<2x2xf32>
    %46 = arith.addf %40, %45 : vector<2x2xf32>
    %47 = vector.extract_strided_slice %35 {offsets = [0, 2], sizes = [2, 1], strides = [1, 1]} : vector<2x32xf32> to vector<2x1xf32>
    %48 = vector.extract_strided_slice %34 {offsets = [2, 0], sizes = [1, 2], strides = [1, 1]} : vector<32x2xf32> to vector<1x2xf32>
    %49 = vector.broadcast %47 : vector<2x1xf32> to vector<2x2xf32>
    %50 = vector.broadcast %48 : vector<1x2xf32> to vector<2x2xf32>
    %51 = arith.mulf %49, %50 : vector<2x2xf32>
    %52 = arith.addf %46, %51 : vector<2x2xf32>
    %53 = vector.extract_strided_slice %35 {offsets = [0, 3], sizes = [2, 1], strides = [1, 1]} : vector<2x32xf32> to vector<2x1xf32>
    %54 = vector.extract_strided_slice %34 {offsets = [3, 0], sizes = [1, 2], strides = [1, 1]} : vector<32x2xf32> to vector<1x2xf32>
    %55 = vector.broadcast %53 : vector<2x1xf32> to vector<2x2xf32>
    %56 = vector.broadcast %54 : vector<1x2xf32> to vector<2x2xf32>
    %57 = arith.mulf %55, %56 : vector<2x2xf32>
    %58 = arith.addf %52, %57 : vector<2x2xf32>
    %59 = vector.extract_strided_slice %35 {offsets = [0, 4], sizes = [2, 1], strides = [1, 1]} : vector<2x32xf32> to vector<2x1xf32>
    %60 = vector.extract_strided_slice %34 {offsets = [4, 0], sizes = [1, 2], strides = [1, 1]} : vector<32x2xf32> to vector<1x2xf32>
    %61 = vector.broadcast %59 : vector<2x1xf32> to vector<2x2xf32>
    %62 = vector.broadcast %60 : vector<1x2xf32> to vector<2x2xf32>
    %63 = arith.mulf %61, %62 : vector<2x2xf32>
    %64 = arith.addf %58, %63 : vector<2x2xf32>
    %65 = vector.extract_strided_slice %35 {offsets = [0, 5], sizes = [2, 1], strides = [1, 1]} : vector<2x32xf32> to vector<2x1xf32>
    %66 = vector.extract_strided_slice %34 {offsets = [5, 0], sizes = [1, 2], strides = [1, 1]} : vector<32x2xf32> to vector<1x2xf32>
    %67 = vector.broadcast %65 : vector<2x1xf32> to vector<2x2xf32>
    %68 = vector.broadcast %66 : vector<1x2xf32> to vector<2x2xf32>
    %69 = arith.mulf %67, %68 : vector<2x2xf32>
    %70 = arith.addf %64, %69 : vector<2x2xf32>
    %71 = vector.extract_strided_slice %35 {offsets = [0, 6], sizes = [2, 1], strides = [1, 1]} : vector<2x32xf32> to vector<2x1xf32>
    %72 = vector.extract_strided_slice %34 {offsets = [6, 0], sizes = [1, 2], strides = [1, 1]} : vector<32x2xf32> to vector<1x2xf32>
    %73 = vector.broadcast %71 : vector<2x1xf32> to vector<2x2xf32>
    %74 = vector.broadcast %72 : vector<1x2xf32> to vector<2x2xf32>
    %75 = arith.mulf %73, %74 : vector<2x2xf32>
    %76 = arith.addf %70, %75 : vector<2x2xf32>
    %77 = vector.extract_strided_slice %35 {offsets = [0, 7], sizes = [2, 1], strides = [1, 1]} : vector<2x32xf32> to vector<2x1xf32>
    %78 = vector.extract_strided_slice %34 {offsets = [7, 0], sizes = [1, 2], strides = [1, 1]} : vector<32x2xf32> to vector<1x2xf32>
    %79 = vector.broadcast %77 : vector<2x1xf32> to vector<2x2xf32>
    %80 = vector.broadcast %78 : vector<1x2xf32> to vector<2x2xf32>
    %81 = arith.mulf %79, %80 : vector<2x2xf32>
    %82 = arith.addf %76, %81 : vector<2x2xf32>
    %83 = vector.extract_strided_slice %35 {offsets = [0, 8], sizes = [2, 1], strides = [1, 1]} : vector<2x32xf32> to vector<2x1xf32>
    %84 = vector.extract_strided_slice %34 {offsets = [8, 0], sizes = [1, 2], strides = [1, 1]} : vector<32x2xf32> to vector<1x2xf32>
    %85 = vector.broadcast %83 : vector<2x1xf32> to vector<2x2xf32>
    %86 = vector.broadcast %84 : vector<1x2xf32> to vector<2x2xf32>
    %87 = arith.mulf %85, %86 : vector<2x2xf32>
    %88 = arith.addf %82, %87 : vector<2x2xf32>
    %89 = vector.extract_strided_slice %35 {offsets = [0, 9], sizes = [2, 1], strides = [1, 1]} : vector<2x32xf32> to vector<2x1xf32>
    %90 = vector.extract_strided_slice %34 {offsets = [9, 0], sizes = [1, 2], strides = [1, 1]} : vector<32x2xf32> to vector<1x2xf32>
    %91 = vector.broadcast %89 : vector<2x1xf32> to vector<2x2xf32>
    %92 = vector.broadcast %90 : vector<1x2xf32> to vector<2x2xf32>
    %93 = arith.mulf %91, %92 : vector<2x2xf32>
    %94 = arith.addf %88, %93 : vector<2x2xf32>
    %95 = vector.extract_strided_slice %35 {offsets = [0, 10], sizes = [2, 1], strides = [1, 1]} : vector<2x32xf32> to vector<2x1xf32>
    %96 = vector.extract_strided_slice %34 {offsets = [10, 0], sizes = [1, 2], strides = [1, 1]} : vector<32x2xf32> to vector<1x2xf32>
    %97 = vector.broadcast %95 : vector<2x1xf32> to vector<2x2xf32>
    %98 = vector.broadcast %96 : vector<1x2xf32> to vector<2x2xf32>
    %99 = arith.mulf %97, %98 : vector<2x2xf32>
    %100 = arith.addf %94, %99 : vector<2x2xf32>
    %101 = vector.extract_strided_slice %35 {offsets = [0, 11], sizes = [2, 1], strides = [1, 1]} : vector<2x32xf32> to vector<2x1xf32>
    %102 = vector.extract_strided_slice %34 {offsets = [11, 0], sizes = [1, 2], strides = [1, 1]} : vector<32x2xf32> to vector<1x2xf32>
    %103 = vector.broadcast %101 : vector<2x1xf32> to vector<2x2xf32>
    %104 = vector.broadcast %102 : vector<1x2xf32> to vector<2x2xf32>
    %105 = arith.mulf %103, %104 : vector<2x2xf32>
    %106 = arith.addf %100, %105 : vector<2x2xf32>
    %107 = vector.extract_strided_slice %35 {offsets = [0, 12], sizes = [2, 1], strides = [1, 1]} : vector<2x32xf32> to vector<2x1xf32>
    %108 = vector.extract_strided_slice %34 {offsets = [12, 0], sizes = [1, 2], strides = [1, 1]} : vector<32x2xf32> to vector<1x2xf32>
    %109 = vector.broadcast %107 : vector<2x1xf32> to vector<2x2xf32>
    %110 = vector.broadcast %108 : vector<1x2xf32> to vector<2x2xf32>
    %111 = arith.mulf %109, %110 : vector<2x2xf32>
    %112 = arith.addf %106, %111 : vector<2x2xf32>
    %113 = vector.extract_strided_slice %35 {offsets = [0, 13], sizes = [2, 1], strides = [1, 1]} : vector<2x32xf32> to vector<2x1xf32>
    %114 = vector.extract_strided_slice %34 {offsets = [13, 0], sizes = [1, 2], strides = [1, 1]} : vector<32x2xf32> to vector<1x2xf32>
    %115 = vector.broadcast %113 : vector<2x1xf32> to vector<2x2xf32>
    %116 = vector.broadcast %114 : vector<1x2xf32> to vector<2x2xf32>
    %117 = arith.mulf %115, %116 : vector<2x2xf32>
    %118 = arith.addf %112, %117 : vector<2x2xf32>
    %119 = vector.extract_strided_slice %35 {offsets = [0, 14], sizes = [2, 1], strides = [1, 1]} : vector<2x32xf32> to vector<2x1xf32>
    %120 = vector.extract_strided_slice %34 {offsets = [14, 0], sizes = [1, 2], strides = [1, 1]} : vector<32x2xf32> to vector<1x2xf32>
    %121 = vector.broadcast %119 : vector<2x1xf32> to vector<2x2xf32>
    %122 = vector.broadcast %120 : vector<1x2xf32> to vector<2x2xf32>
    %123 = arith.mulf %121, %122 : vector<2x2xf32>
    %124 = arith.addf %118, %123 : vector<2x2xf32>
    %125 = vector.extract_strided_slice %35 {offsets = [0, 15], sizes = [2, 1], strides = [1, 1]} : vector<2x32xf32> to vector<2x1xf32>
    %126 = vector.extract_strided_slice %34 {offsets = [15, 0], sizes = [1, 2], strides = [1, 1]} : vector<32x2xf32> to vector<1x2xf32>
    %127 = vector.broadcast %125 : vector<2x1xf32> to vector<2x2xf32>
    %128 = vector.broadcast %126 : vector<1x2xf32> to vector<2x2xf32>
    %129 = arith.mulf %127, %128 : vector<2x2xf32>
    %130 = arith.addf %124, %129 : vector<2x2xf32>
    %131 = vector.extract_strided_slice %35 {offsets = [0, 16], sizes = [2, 1], strides = [1, 1]} : vector<2x32xf32> to vector<2x1xf32>
    %132 = vector.extract_strided_slice %34 {offsets = [16, 0], sizes = [1, 2], strides = [1, 1]} : vector<32x2xf32> to vector<1x2xf32>
    %133 = vector.broadcast %131 : vector<2x1xf32> to vector<2x2xf32>
    %134 = vector.broadcast %132 : vector<1x2xf32> to vector<2x2xf32>
    %135 = arith.mulf %133, %134 : vector<2x2xf32>
    %136 = arith.addf %130, %135 : vector<2x2xf32>
    %137 = vector.extract_strided_slice %35 {offsets = [0, 17], sizes = [2, 1], strides = [1, 1]} : vector<2x32xf32> to vector<2x1xf32>
    %138 = vector.extract_strided_slice %34 {offsets = [17, 0], sizes = [1, 2], strides = [1, 1]} : vector<32x2xf32> to vector<1x2xf32>
    %139 = vector.broadcast %137 : vector<2x1xf32> to vector<2x2xf32>
    %140 = vector.broadcast %138 : vector<1x2xf32> to vector<2x2xf32>
    %141 = arith.mulf %139, %140 : vector<2x2xf32>
    %142 = arith.addf %136, %141 : vector<2x2xf32>
    %143 = vector.extract_strided_slice %35 {offsets = [0, 18], sizes = [2, 1], strides = [1, 1]} : vector<2x32xf32> to vector<2x1xf32>
    %144 = vector.extract_strided_slice %34 {offsets = [18, 0], sizes = [1, 2], strides = [1, 1]} : vector<32x2xf32> to vector<1x2xf32>
    %145 = vector.broadcast %143 : vector<2x1xf32> to vector<2x2xf32>
    %146 = vector.broadcast %144 : vector<1x2xf32> to vector<2x2xf32>
    %147 = arith.mulf %145, %146 : vector<2x2xf32>
    %148 = arith.addf %142, %147 : vector<2x2xf32>
    %149 = vector.extract_strided_slice %35 {offsets = [0, 19], sizes = [2, 1], strides = [1, 1]} : vector<2x32xf32> to vector<2x1xf32>
    %150 = vector.extract_strided_slice %34 {offsets = [19, 0], sizes = [1, 2], strides = [1, 1]} : vector<32x2xf32> to vector<1x2xf32>
    %151 = vector.broadcast %149 : vector<2x1xf32> to vector<2x2xf32>
    %152 = vector.broadcast %150 : vector<1x2xf32> to vector<2x2xf32>
    %153 = arith.mulf %151, %152 : vector<2x2xf32>
    %154 = arith.addf %148, %153 : vector<2x2xf32>
    %155 = vector.extract_strided_slice %35 {offsets = [0, 20], sizes = [2, 1], strides = [1, 1]} : vector<2x32xf32> to vector<2x1xf32>
    %156 = vector.extract_strided_slice %34 {offsets = [20, 0], sizes = [1, 2], strides = [1, 1]} : vector<32x2xf32> to vector<1x2xf32>
    %157 = vector.broadcast %155 : vector<2x1xf32> to vector<2x2xf32>
    %158 = vector.broadcast %156 : vector<1x2xf32> to vector<2x2xf32>
    %159 = arith.mulf %157, %158 : vector<2x2xf32>
    %160 = arith.addf %154, %159 : vector<2x2xf32>
    %161 = vector.extract_strided_slice %35 {offsets = [0, 21], sizes = [2, 1], strides = [1, 1]} : vector<2x32xf32> to vector<2x1xf32>
    %162 = vector.extract_strided_slice %34 {offsets = [21, 0], sizes = [1, 2], strides = [1, 1]} : vector<32x2xf32> to vector<1x2xf32>
    %163 = vector.broadcast %161 : vector<2x1xf32> to vector<2x2xf32>
    %164 = vector.broadcast %162 : vector<1x2xf32> to vector<2x2xf32>
    %165 = arith.mulf %163, %164 : vector<2x2xf32>
    %166 = arith.addf %160, %165 : vector<2x2xf32>
    %167 = vector.extract_strided_slice %35 {offsets = [0, 22], sizes = [2, 1], strides = [1, 1]} : vector<2x32xf32> to vector<2x1xf32>
    %168 = vector.extract_strided_slice %34 {offsets = [22, 0], sizes = [1, 2], strides = [1, 1]} : vector<32x2xf32> to vector<1x2xf32>
    %169 = vector.broadcast %167 : vector<2x1xf32> to vector<2x2xf32>
    %170 = vector.broadcast %168 : vector<1x2xf32> to vector<2x2xf32>
    %171 = arith.mulf %169, %170 : vector<2x2xf32>
    %172 = arith.addf %166, %171 : vector<2x2xf32>
    %173 = vector.extract_strided_slice %35 {offsets = [0, 23], sizes = [2, 1], strides = [1, 1]} : vector<2x32xf32> to vector<2x1xf32>
    %174 = vector.extract_strided_slice %34 {offsets = [23, 0], sizes = [1, 2], strides = [1, 1]} : vector<32x2xf32> to vector<1x2xf32>
    %175 = vector.broadcast %173 : vector<2x1xf32> to vector<2x2xf32>
    %176 = vector.broadcast %174 : vector<1x2xf32> to vector<2x2xf32>
    %177 = arith.mulf %175, %176 : vector<2x2xf32>
    %178 = arith.addf %172, %177 : vector<2x2xf32>
    %179 = vector.extract_strided_slice %35 {offsets = [0, 24], sizes = [2, 1], strides = [1, 1]} : vector<2x32xf32> to vector<2x1xf32>
    %180 = vector.extract_strided_slice %34 {offsets = [24, 0], sizes = [1, 2], strides = [1, 1]} : vector<32x2xf32> to vector<1x2xf32>
    %181 = vector.broadcast %179 : vector<2x1xf32> to vector<2x2xf32>
    %182 = vector.broadcast %180 : vector<1x2xf32> to vector<2x2xf32>
    %183 = arith.mulf %181, %182 : vector<2x2xf32>
    %184 = arith.addf %178, %183 : vector<2x2xf32>
    %185 = vector.extract_strided_slice %35 {offsets = [0, 25], sizes = [2, 1], strides = [1, 1]} : vector<2x32xf32> to vector<2x1xf32>
    %186 = vector.extract_strided_slice %34 {offsets = [25, 0], sizes = [1, 2], strides = [1, 1]} : vector<32x2xf32> to vector<1x2xf32>
    %187 = vector.broadcast %185 : vector<2x1xf32> to vector<2x2xf32>
    %188 = vector.broadcast %186 : vector<1x2xf32> to vector<2x2xf32>
    %189 = arith.mulf %187, %188 : vector<2x2xf32>
    %190 = arith.addf %184, %189 : vector<2x2xf32>
    %191 = vector.extract_strided_slice %35 {offsets = [0, 26], sizes = [2, 1], strides = [1, 1]} : vector<2x32xf32> to vector<2x1xf32>
    %192 = vector.extract_strided_slice %34 {offsets = [26, 0], sizes = [1, 2], strides = [1, 1]} : vector<32x2xf32> to vector<1x2xf32>
    %193 = vector.broadcast %191 : vector<2x1xf32> to vector<2x2xf32>
    %194 = vector.broadcast %192 : vector<1x2xf32> to vector<2x2xf32>
    %195 = arith.mulf %193, %194 : vector<2x2xf32>
    %196 = arith.addf %190, %195 : vector<2x2xf32>
    %197 = vector.extract_strided_slice %35 {offsets = [0, 27], sizes = [2, 1], strides = [1, 1]} : vector<2x32xf32> to vector<2x1xf32>
    %198 = vector.extract_strided_slice %34 {offsets = [27, 0], sizes = [1, 2], strides = [1, 1]} : vector<32x2xf32> to vector<1x2xf32>
    %199 = vector.broadcast %197 : vector<2x1xf32> to vector<2x2xf32>
    %200 = vector.broadcast %198 : vector<1x2xf32> to vector<2x2xf32>
    %201 = arith.mulf %199, %200 : vector<2x2xf32>
    %202 = arith.addf %196, %201 : vector<2x2xf32>
    %203 = vector.extract_strided_slice %35 {offsets = [0, 28], sizes = [2, 1], strides = [1, 1]} : vector<2x32xf32> to vector<2x1xf32>
    %204 = vector.extract_strided_slice %34 {offsets = [28, 0], sizes = [1, 2], strides = [1, 1]} : vector<32x2xf32> to vector<1x2xf32>
    %205 = vector.broadcast %203 : vector<2x1xf32> to vector<2x2xf32>
    %206 = vector.broadcast %204 : vector<1x2xf32> to vector<2x2xf32>
    %207 = arith.mulf %205, %206 : vector<2x2xf32>
    %208 = arith.addf %202, %207 : vector<2x2xf32>
    %209 = vector.extract_strided_slice %35 {offsets = [0, 29], sizes = [2, 1], strides = [1, 1]} : vector<2x32xf32> to vector<2x1xf32>
    %210 = vector.extract_strided_slice %34 {offsets = [29, 0], sizes = [1, 2], strides = [1, 1]} : vector<32x2xf32> to vector<1x2xf32>
    %211 = vector.broadcast %209 : vector<2x1xf32> to vector<2x2xf32>
    %212 = vector.broadcast %210 : vector<1x2xf32> to vector<2x2xf32>
    %213 = arith.mulf %211, %212 : vector<2x2xf32>
    %214 = arith.addf %208, %213 : vector<2x2xf32>
    %215 = vector.extract_strided_slice %35 {offsets = [0, 30], sizes = [2, 1], strides = [1, 1]} : vector<2x32xf32> to vector<2x1xf32>
    %216 = vector.extract_strided_slice %34 {offsets = [30, 0], sizes = [1, 2], strides = [1, 1]} : vector<32x2xf32> to vector<1x2xf32>
    %217 = vector.broadcast %215 : vector<2x1xf32> to vector<2x2xf32>
    %218 = vector.broadcast %216 : vector<1x2xf32> to vector<2x2xf32>
    %219 = arith.mulf %217, %218 : vector<2x2xf32>
    %220 = arith.addf %214, %219 : vector<2x2xf32>
    %221 = vector.extract_strided_slice %35 {offsets = [0, 31], sizes = [2, 1], strides = [1, 1]} : vector<2x32xf32> to vector<2x1xf32>
    %222 = vector.extract_strided_slice %34 {offsets = [31, 0], sizes = [1, 2], strides = [1, 1]} : vector<32x2xf32> to vector<1x2xf32>
    %223 = vector.broadcast %221 : vector<2x1xf32> to vector<2x2xf32>
    %224 = vector.broadcast %222 : vector<1x2xf32> to vector<2x2xf32>
    %225 = arith.mulf %223, %224 : vector<2x2xf32>
    %226 = arith.addf %220, %225 : vector<2x2xf32>
    %c0_11 = arith.constant 0 : index
    %c0_12 = arith.constant 0 : index
    %227 = vector.load %arg7[%c0_11, %c0_12] : memref<2x2xf32, #tpu.memory_space<vmem>>, vector<2x2xf32>
    tpu.vector_store %arg7[%c0_11, %c0_12], %226 {strides = array<i32>} : memref<2x2xf32, #tpu.memory_space<vmem>>, vector<2x2xf32>,
    return
  }
  func.func @transform_0(%arg0: i32) -> (i32, i32) {
    %c0_i32 = arith.constant 0 : i32
    %c0_i32_0 = arith.constant 0 : i32
    return %c0_i32, %arg0 : i32, i32
  }
  func.func @transform_1(%arg0: i32) -> (i32, i32) {
    %c0_i32 = arith.constant 0 : i32
    %c0_i32_0 = arith.constant 0 : i32
    %c0_i32_1 = arith.constant 0 : i32
    return %c0_i32, %c0_i32_0 : i32, i32
  }
  func.func @transform_2(%arg0: i32) -> (i32, i32) {
    %c0_i32 = arith.constant 0 : i32
    %c0_i32_0 = arith.constant 0 : i32
    %c0_i32_1 = arith.constant 0 : i32
    return %c0_i32, %c0_i32_0 : i32, i32
  }
  func.func @transform_3(%arg0: i32) -> (i32, i32) {
    %c0_i32 = arith.constant 0 : i32
    %c0_i32_0 = arith.constant 0 : i32
    %c0_i32_1 = arith.constant 0 : i32
    return %c0_i32, %c0_i32_0 : i32, i32
  }
  func.func @transform_4(%arg0: i32) -> (i32, i32) {
    %c0_i32 = arith.constant 0 : i32
    %c0_i32_0 = arith.constant 0 : i32
    %c0_i32_1 = arith.constant 0 : i32
    return %c0_i32, %c0_i32_0 : i32, i32
  }
  func.func @transform_5(%arg0: i32) -> (i32, i32) {
    %c0_i32 = arith.constant 0 : i32
    %c0_i32_0 = arith.constant 0 : i32
    %c0_i32_1 = arith.constant 0 : i32
    return %c0_i32, %c0_i32_0 : i32, i32
  }
  func.func @transform_6(%arg0: i32) -> (i32, i32) {
    %c0_i32 = arith.constant 0 : i32
    %c0_i32_0 = arith.constant 0 : i32
    return %c0_i32, %arg0 : i32, i32
  }
}

</mosaic_0001>

<llo_original>
// kernel: base_nn_forward.1
$region0: #{base_nn_forward.1}
  #allocation0 [shape = 'u32[]', space=smem, size = 0x4, offset = 0x4, fixed_abs, tag = 'smem constant byte address 0x4 - core index']
  #allocation1 [shape = 'u32[144,128]{1,0:T(1,128)}', space=vmem, size = 0x12000, scoped, tag = 'internal scratch']
  %s0 = inlined_call_operand.vmem [shape: f32[4,2], index: 0, kind: input, shape index: {}]
  %s1 = inlined_call_operand.vmem [shape: f32[32,4], index: 1, kind: input, shape index: {}]
  %s2 = inlined_call_operand.vmem [shape: f32[32,1], index: 2, kind: input, shape index: {}]
  %s3 = inlined_call_operand.vmem [shape: f32[32,32], index: 3, kind: input, shape index: {}]
  %s4 = inlined_call_operand.vmem [shape: f32[32,1], index: 4, kind: input, shape index: {}]
  %s5 = inlined_call_operand.vmem [shape: f32[2,32], index: 5, kind: input, shape index: {}]
  %s6 = inlined_call_operand.vmem [shape: f32[2,2], index: 6, kind: output, shape index: {}]
  %s7 = sld [smem:[#allocation0]]
  $region34: #{base_nn_forward.1} parent=0
    _
  %s9 = ssub.s32 1, %s7
  %s10 = scalar_select 0, %s9, %s7
  // Predicated region
  $region2: #{base_nn_forward.1} parent=0 // pred_check
    _
  $region3: #{base_nn_forward.1} parent=0 // pred_check_branch
    %12 = sbr.rel (0) target = $region5
  $region4: #{base_nn_forward.1} parent=0 // pred_region
    _
  $region5: #{base_nn_forward.1} parent=0 // pred_fallthru
    _
  // Predicated region
  $region6: #{base_nn_forward.1} parent=0 // pred_check
    _
  $region7: #{base_nn_forward.1} parent=0 // pred_check_branch
    %14 = sbr.rel (0) target = $region9
  $region8: #{base_nn_forward.1} parent=0 // pred_region
    _
  $region9: #{base_nn_forward.1} parent=0 // pred_fallthru
    _
  // Predicated region
  $region10: #{base_nn_forward.1} parent=0 // pred_check
    _
  $region11: #{base_nn_forward.1} parent=0 // pred_check_branch
    %16 = sbr.rel (0) target = $region13
  $region12: #{base_nn_forward.1} parent=0 // pred_region
    _
  $region13: #{base_nn_forward.1} parent=0 // pred_fallthru
    _
  // Predicated region
  $region14: #{base_nn_forward.1} parent=0 // pred_check
    _
  $region15: #{base_nn_forward.1} parent=0 // pred_check_branch
    %18 = sbr.rel (0) target = $region17
  $region16: #{base_nn_forward.1} parent=0 // pred_region
    _
  $region17: #{base_nn_forward.1} parent=0 // pred_fallthru
    _
  // Predicated region
  $region18: #{base_nn_forward.1} parent=0 // pred_check
    _
  $region19: #{base_nn_forward.1} parent=0 // pred_check_branch
    %20 = sbr.rel (0) target = $region21
  $region20: #{base_nn_forward.1} parent=0 // pred_region
    _
  $region21: #{base_nn_forward.1} parent=0 // pred_fallthru
    _
  // Predicated region
  $region22: #{base_nn_forward.1} parent=0 // pred_check
    _
  $region23: #{base_nn_forward.1} parent=0 // pred_check_branch
    %22 = sbr.rel (0) target = $region25
  $region24: #{base_nn_forward.1} parent=0 // pred_region
    _
  $region25: #{base_nn_forward.1} parent=0 // pred_fallthru
    _
  %v23 = vld [vmem:[%s0] sm:$0xf]
  %v24 = vld [vmem:[%s1] sm:$0xff]
  %v25 = vld [vmem:[%s1 + $0x8] sm:$0xff]
  %v26 = vld [vmem:[%s1 + $0x10] sm:$0xff]
  %v27 = vld [vmem:[%s1 + $0x18] sm:$0xff]
  %v28 = vld [vmem:[%s2] sm:$0xff]
  %v29 = vld [vmem:[%s2 + $0x8] sm:$0xff]
  %v30 = vld [vmem:[%s2 + $0x10] sm:$0xff]
  %v31 = vld [vmem:[%s2 + $0x18] sm:$0xff]
  %33 = vset.pattern.permute.xlu0 0
  %34 = vperm.xlu0 %33, %v24
  %v35 = vpop.permute.xlu0 %34
  %38 = vset.pattern.permute.xlu0 0
  %39 = vperm.xlu0 %38, %v25
  %v40 = vpop.permute.xlu0 %39
  %43 = vset.pattern.permute.xlu0 0
  %44 = vperm.xlu0 %43, %v26
  %v45 = vpop.permute.xlu0 %44
  %48 = vset.pattern.permute.xlu0 0
  %49 = vperm.xlu0 %48, %v27
  %v50 = vpop.permute.xlu0 %49
  %v52 = vlaneseq
  %v53 = vshrl.u32 %v52, 7
  %v54 = vsub.s32 0, %v53
  %v55 = vrot.slane %v23, %v54
  %v56 = vmul.f32 %v35, %v55
  %v57 = vmul.f32 %v40, %v55
  %v58 = vmul.f32 %v45, %v55
  %v59 = vmul.f32 %v50, %v55
  %61 = vset.pattern.permute.xlu0 0
  %62 = vperm.xlu0 %61, %v28
  %v63 = vpop.permute.xlu0 %62
  %66 = vset.pattern.permute.xlu0 0
  %67 = vperm.xlu0 %66, %v29
  %v68 = vpop.permute.xlu0 %67
  %71 = vset.pattern.permute.xlu0 0
  %72 = vperm.xlu0 %71, %v30
  %v73 = vpop.permute.xlu0 %72
  %76 = vset.pattern.permute.xlu0 0
  %77 = vperm.xlu0 %76, %v31
  %v78 = vpop.permute.xlu0 %77
  %v80 = vadd.f32 %v63, %v56
  %v81 = vadd.f32 %v68, %v57
  %v82 = vadd.f32 %v73, %v58
  %v83 = vadd.f32 %v78, %v59
  %84 = vset.pattern.permute.xlu0 1
  %85 = vperm.xlu0 %84, %v24
  %v86 = vpop.permute.xlu0 %85
  %88 = vset.pattern.permute.xlu0 1
  %89 = vperm.xlu0 %88, %v25
  %v90 = vpop.permute.xlu0 %89
  %92 = vset.pattern.permute.xlu0 1
  %93 = vperm.xlu0 %92, %v26
  %v94 = vpop.permute.xlu0 %93
  %96 = vset.pattern.permute.xlu0 1
  %97 = vperm.xlu0 %96, %v27
  %v98 = vpop.permute.xlu0 %97
  %v100 = vlaneseq
  %v101 = vshrl.u32 %v100, 7
  %v102 = vsub.s32 1, %v101
  %v103 = vrot.slane %v23, %v102
  %v104 = vmul.f32 %v86, %v103
  %v105 = vmul.f32 %v90, %v103
  %v106 = vmul.f32 %v94, %v103
  %v107 = vmul.f32 %v98, %v103
  %v108 = vadd.f32 %v80, %v104
  %v109 = vadd.f32 %v81, %v105
  %v110 = vadd.f32 %v82, %v106
  %v111 = vadd.f32 %v83, %v107
  %112 = vset.pattern.permute.xlu0 2
  %113 = vperm.xlu0 %112, %v24
  %v114 = vpop.permute.xlu0 %113
  %116 = vset.pattern.permute.xlu0 2
  %117 = vperm.xlu0 %116, %v25
  %v118 = vpop.permute.xlu0 %117
  %120 = vset.pattern.permute.xlu0 2
  %121 = vperm.xlu0 %120, %v26
  %v122 = vpop.permute.xlu0 %121
  %124 = vset.pattern.permute.xlu0 2
  %125 = vperm.xlu0 %124, %v27
  %v126 = vpop.permute.xlu0 %125
  %v128 = vlaneseq
  %v129 = vshrl.u32 %v128, 7
  %v130 = vsub.s32 2, %v129
  %v131 = vrot.slane %v23, %v130
  %v132 = vmul.f32 %v114, %v131
  %v133 = vmul.f32 %v118, %v131
  %v134 = vmul.f32 %v122, %v131
  %v135 = vmul.f32 %v126, %v131
  %v136 = vadd.f32 %v108, %v132
  %v137 = vadd.f32 %v109, %v133
  %v138 = vadd.f32 %v110, %v134
  %v139 = vadd.f32 %v111, %v135
  %140 = vset.pattern.permute.xlu0 3
  %141 = vperm.xlu0 %140, %v24
  %v142 = vpop.permute.xlu0 %141
  %144 = vset.pattern.permute.xlu0 3
  %145 = vperm.xlu0 %144, %v25
  %v146 = vpop.permute.xlu0 %145
  %148 = vset.pattern.permute.xlu0 3
  %149 = vperm.xlu0 %148, %v26
  %v150 = vpop.permute.xlu0 %149
  %152 = vset.pattern.permute.xlu0 3
  %153 = vperm.xlu0 %152, %v27
  %v154 = vpop.permute.xlu0 %153
  %v156 = vlaneseq
  %v157 = vshrl.u32 %v156, 7
  %v158 = vsub.s32 3, %v157
  %v159 = vrot.slane %v23, %v158
  %v160 = vmul.f32 %v142, %v159
  %v161 = vmul.f32 %v146, %v159
  %v162 = vmul.f32 %v150, %v159
  %v163 = vmul.f32 %v154, %v159
  %v164 = vadd.f32 %v136, %v160
  %v165 = vadd.f32 %v137, %v161
  %v166 = vadd.f32 %v138, %v162
  %v167 = vadd.f32 %v139, %v163
  %v168 = vtanh.pop %v164
  %v169 = vtanh.pop %v165
  %v170 = vtanh.pop %v166
  %v171 = vtanh.pop %v167
  %v172 = vld [vmem:[%s3] sm:$0xff]
  %v173 = vld [vmem:[%s3 + $0x8] sm:$0xff]
  %v174 = vld [vmem:[%s3 + $0x10] sm:$0xff]
  %v175 = vld [vmem:[%s3 + $0x18] sm:$0xff]
  %v176 = vld [vmem:[%s4] sm:$0xff]
  %v177 = vld [vmem:[%s4 + $0x8] sm:$0xff]
  %v178 = vld [vmem:[%s4 + $0x10] sm:$0xff]
  %v179 = vld [vmem:[%s4 + $0x18] sm:$0xff]
  %181 = vset.pattern.permute.xlu0 0
  %182 = vperm.xlu0 %181, %v176
  %v183 = vpop.permute.xlu0 %182
  %186 = vset.pattern.permute.xlu0 0
  %187 = vperm.xlu0 %186, %v177
  %v188 = vpop.permute.xlu0 %187
  %191 = vset.pattern.permute.xlu0 0
  %192 = vperm.xlu0 %191, %v178
  %v193 = vpop.permute.xlu0 %192
  %196 = vset.pattern.permute.xlu0 0
  %197 = vperm.xlu0 %196, %v179
  %v198 = vpop.permute.xlu0 %197
  %vm200 = vcmask 261120
  %v202 = vsel %vm200, %v172, 0
  %v205 = vsel %vm200, %v173, 0
  %v208 = vsel %vm200, %v174, 0
  %v211 = vsel %vm200, %v175, 0
  %213 = vmatprep.subr.mxu0 0.0
  %214 = vmatpush1.msra.mxu0 %v168
  %215 = vmatprep.subr.mxu0 0.0
  %216 = vmatpush1.msra.mxu0 %v169
  %217 = vmatprep.subr.mxu0 0.0
  %218 = vmatpush1.msra.mxu0 %v170
  %219 = vmatprep.subr.mxu0 0.0
  %220 = vmatpush1.msra.mxu0 %v171
  %221 = vmatprep.subr.mxu0 0.0
  %222 = vmatpush1.msra.mxu0 0.0
  %223 = vmatprep.subr.mxu0 0.0
  %224 = vmatpush1.msra.mxu0 0.0
  %225 = vmatprep.subr.mxu0 0.0
  %226 = vmatpush1.msra.mxu0 0.0
  %227 = vmatprep.subr.mxu0 0.0
  %228 = vmatpush1.msra.mxu0 0.0
  %229 = vmatprep.subr.mxu0 0.0
  %230 = vmatpush1.msra.mxu0 0.0
  %231 = vmatprep.subr.mxu0 0.0
  %232 = vmatpush1.msra.mxu0 0.0
  %233 = vmatprep.subr.mxu0 0.0
  %234 = vmatpush1.msra.mxu0 0.0
  %235 = vmatprep.subr.mxu0 0.0
  %236 = vmatpush1.msra.mxu0 0.0
  %237 = vmatprep.subr.mxu0 0.0
  %238 = vmatpush1.msra.mxu0 0.0
  %239 = vmatprep.subr.mxu0 0.0
  %240 = vmatpush1.msra.mxu0 0.0
  %241 = vmatprep.subr.mxu0 0.0
  %242 = vmatpush1.msra.mxu0 0.0
  %243 = vmatprep.subr.mxu0 0.0
  %244 = vmatpush1.msra.mxu0 0.0
  %245 = vmatprep.subr.mxu0 0.0
  %246 = vmatpush1.msra.mxu0 0.0
  %247 = vmatprep.subr.mxu0 0.0
  %248 = vmatpush1.msra.mxu0 0.0
  %249 = vmatprep.subr.mxu0 0.0
  %250 = vmatpush1.msra.mxu0 0.0
  %251 = vmatprep.subr.mxu0 0.0
  %252 = vmatpush1.msra.mxu0 0.0
  %253 = vmatprep.subr.mxu0 0.0
  %254 = vmatpush1.msra.mxu0 0.0
  %255 = vmatprep.subr.mxu0 0.0
  %256 = vmatpush1.msra.mxu0 0.0
  %257 = vmatprep.subr.mxu0 0.0
  %258 = vmatpush1.msra.mxu0 0.0
  %259 = vmatprep.subr.mxu0 0.0
  %260 = vmatpush1.msra.mxu0 0.0
  %261 = vmatprep.subr.mxu0 0.0
  %262 = vmatpush1.msra.mxu0 0.0
  %263 = vmatprep.subr.mxu0 0.0
  %264 = vmatpush1.msra.mxu0 0.0
  %265 = vmatprep.subr.mxu0 0.0
  %266 = vmatpush1.msra.mxu0 0.0
  %267 = vmatprep.subr.mxu0 0.0
  %268 = vmatpush1.msra.mxu0 0.0
  %269 = vmatprep.subr.mxu0 0.0
  %270 = vmatpush1.msra.mxu0 0.0
  %271 = vmatprep.subr.mxu0 0.0
  %272 = vmatpush1.msra.mxu0 0.0
  %273 = vmatprep.subr.mxu0 0.0
  %274 = vmatpush1.msra.mxu0 0.0
  %275 = vmatprep.subr.mxu0 0.0
  %276 = vmatpush1.msra.mxu0 0.0
  %277 = vmatprep.mubr.f32.mxu0 0.0
  %278 = vmatmul.mubr.f32.gmra.mrb[0].mxu0 %v202
  %v279 = vpop.f32.mrb[0].mxu0
  %v280 = vadd.f32 %v183, %v279
  %v281 = vpop.f32.mrb[0].mxu0
  %282 = vmatprep.mubr.f32.mxu0 0.0
  %283 = vmatmul.mubr.f32.gmra.mrb[0].mxu0 %v205
  %v284 = vpop.f32.mrb[0].mxu0
  %v285 = vadd.f32 %v188, %v284
  %v286 = vpop.f32.mrb[0].mxu0
  %287 = vmatprep.mubr.f32.mxu0 0.0
  %288 = vmatmul.mubr.f32.gmra.mrb[0].mxu0 %v208
  %v289 = vpop.f32.mrb[0].mxu0
  %v290 = vadd.f32 %v193, %v289
  %v291 = vpop.f32.mrb[0].mxu0
  %292 = vmatprep.mubr.f32.mxu0 0.0
  %293 = vmatmul.mubr.f32.gmra.mrb[0].mxu0 %v211
  %v294 = vpop.f32.mrb[0].mxu0
  %v295 = vadd.f32 %v198, %v294
  %v296 = vpop.f32.mrb[0].mxu0
  %297 = vdwg.mxu0
  %v298 = vtanh.pop %v280
  %v299 = vtanh.pop %v285
  %v300 = vtanh.pop %v290
  %v301 = vtanh.pop %v295
  %v302 = vld [vmem:[%s5] sm:$0x3]
  %304 = vset.pattern.permute.xlu0 0
  %305 = vperm.xlu0 %304, %v302
  %v306 = vpop.permute.xlu0 %305
  %v308 = vlaneseq
  %v309 = vshrl.u32 %v308, 7
  %v310 = vsub.s32 0, %v309
  %v311 = vrot.slane %v298, %v310
  %v312 = vmul.f32 %v306, %v311
  %313 = vset.pattern.permute.xlu0 1
  %314 = vperm.xlu0 %313, %v302
  %v315 = vpop.permute.xlu0 %314
  %v317 = vlaneseq
  %v318 = vshrl.u32 %v317, 7
  %v319 = vsub.s32 1, %v318
  %v320 = vrot.slane %v298, %v319
  %v321 = vmul.f32 %v315, %v320
  %v322 = vadd.f32 %v312, %v321
  %323 = vset.pattern.permute.xlu0 2
  %324 = vperm.xlu0 %323, %v302
  %v325 = vpop.permute.xlu0 %324
  %v327 = vlaneseq
  %v328 = vshrl.u32 %v327, 7
  %v329 = vsub.s32 2, %v328
  %v330 = vrot.slane %v298, %v329
  %v331 = vmul.f32 %v325, %v330
  %v332 = vadd.f32 %v322, %v331
  %333 = vset.pattern.permute.xlu0 3
  %334 = vperm.xlu0 %333, %v302
  %v335 = vpop.permute.xlu0 %334
  %v337 = vlaneseq
  %v338 = vshrl.u32 %v337, 7
  %v339 = vsub.s32 3, %v338
  %v340 = vrot.slane %v298, %v339
  %v341 = vmul.f32 %v335, %v340
  %v342 = vadd.f32 %v332, %v341
  %343 = vset.pattern.permute.xlu0 4
  %344 = vperm.xlu0 %343, %v302
  %v345 = vpop.permute.xlu0 %344
  %v347 = vlaneseq
  %v348 = vshrl.u32 %v347, 7
  %v349 = vsub.s32 4, %v348
  %v350 = vrot.slane %v298, %v349
  %v351 = vmul.f32 %v345, %v350
  %v352 = vadd.f32 %v342, %v351
  %353 = vset.pattern.permute.xlu0 5
  %354 = vperm.xlu0 %353, %v302
  %v355 = vpop.permute.xlu0 %354
  %v357 = vlaneseq
  %v358 = vshrl.u32 %v357, 7
  %v359 = vsub.s32 5, %v358
  %v360 = vrot.slane %v298, %v359
  %v361 = vmul.f32 %v355, %v360
  %v362 = vadd.f32 %v352, %v361
  %363 = vset.pattern.permute.xlu0 6
  %364 = vperm.xlu0 %363, %v302
  %v365 = vpop.permute.xlu0 %364
  %v367 = vlaneseq
  %v368 = vshrl.u32 %v367, 7
  %v369 = vsub.s32 6, %v368
  %v370 = vrot.slane %v298, %v369
  %v371 = vmul.f32 %v365, %v370
  %v372 = vadd.f32 %v362, %v371
  %373 = vset.pattern.permute.xlu0 7
  %374 = vperm.xlu0 %373, %v302
  %v375 = vpop.permute.xlu0 %374
  %v377 = vlaneseq
  %v378 = vshrl.u32 %v377, 7
  %v379 = vsub.s32 7, %v378
  %v380 = vrot.slane %v298, %v379
  %v381 = vmul.f32 %v375, %v380
  %v382 = vadd.f32 %v372, %v381
  %383 = vset.pattern.permute.xlu0 8
  %384 = vperm.xlu0 %383, %v302
  %v385 = vpop.permute.xlu0 %384
  %v387 = vlaneseq
  %v388 = vshrl.u32 %v387, 7
  %v389 = vsub.s32 0, %v388
  %v390 = vrot.slane %v299, %v389
  %v391 = vmul.f32 %v385, %v390
  %v392 = vadd.f32 %v382, %v391
  %393 = vset.pattern.permute.xlu0 9
  %394 = vperm.xlu0 %393, %v302
  %v395 = vpop.permute.xlu0 %394
  %v397 = vlaneseq
  %v398 = vshrl.u32 %v397, 7
  %v399 = vsub.s32 1, %v398
  %v400 = vrot.slane %v299, %v399
  %v401 = vmul.f32 %v395, %v400
  %v402 = vadd.f32 %v392, %v401
  %403 = vset.pattern.permute.xlu0 10
  %404 = vperm.xlu0 %403, %v302
  %v405 = vpop.permute.xlu0 %404
  %v407 = vlaneseq
  %v408 = vshrl.u32 %v407, 7
  %v409 = vsub.s32 2, %v408
  %v410 = vrot.slane %v299, %v409
  %v411 = vmul.f32 %v405, %v410
  %v412 = vadd.f32 %v402, %v411
  %413 = vset.pattern.permute.xlu0 11
  %414 = vperm.xlu0 %413, %v302
  %v415 = vpop.permute.xlu0 %414
  %v417 = vlaneseq
  %v418 = vshrl.u32 %v417, 7
  %v419 = vsub.s32 3, %v418
  %v420 = vrot.slane %v299, %v419
  %v421 = vmul.f32 %v415, %v420
  %v422 = vadd.f32 %v412, %v421
  %423 = vset.pattern.permute.xlu0 12
  %424 = vperm.xlu0 %423, %v302
  %v425 = vpop.permute.xlu0 %424
  %v427 = vlaneseq
  %v428 = vshrl.u32 %v427, 7
  %v429 = vsub.s32 4, %v428
  %v430 = vrot.slane %v299, %v429
  %v431 = vmul.f32 %v425, %v430
  %v432 = vadd.f32 %v422, %v431
  %433 = vset.pattern.permute.xlu0 13
  %434 = vperm.xlu0 %433, %v302
  %v435 = vpop.permute.xlu0 %434
  %v437 = vlaneseq
  %v438 = vshrl.u32 %v437, 7
  %v439 = vsub.s32 5, %v438
  %v440 = vrot.slane %v299, %v439
  %v441 = vmul.f32 %v435, %v440
  %v442 = vadd.f32 %v432, %v441
  %443 = vset.pattern.permute.xlu0 14
  %444 = vperm.xlu0 %443, %v302
  %v445 = vpop.permute.xlu0 %444
  %v447 = vlaneseq
  %v448 = vshrl.u32 %v447, 7
  %v449 = vsub.s32 6, %v448
  %v450 = vrot.slane %v299, %v449
  %v451 = vmul.f32 %v445, %v450
  %v452 = vadd.f32 %v442, %v451
  %453 = vset.pattern.permute.xlu0 15
  %454 = vperm.xlu0 %453, %v302
  %v455 = vpop.permute.xlu0 %454
  %v457 = vlaneseq
  %v458 = vshrl.u32 %v457, 7
  %v459 = vsub.s32 7, %v458
  %v460 = vrot.slane %v299, %v459
  %v461 = vmul.f32 %v455, %v460
  %v462 = vadd.f32 %v452, %v461
  %463 = vset.pattern.permute.xlu0 16
  %464 = vperm.xlu0 %463, %v302
  %v465 = vpop.permute.xlu0 %464
  %v467 = vlaneseq
  %v468 = vshrl.u32 %v467, 7
  %v469 = vsub.s32 0, %v468
  %v470 = vrot.slane %v300, %v469
  %v471 = vmul.f32 %v465, %v470
  %v472 = vadd.f32 %v462, %v471
  %473 = vset.pattern.permute.xlu0 17
  %474 = vperm.xlu0 %473, %v302
  %v475 = vpop.permute.xlu0 %474
  %v477 = vlaneseq
  %v478 = vshrl.u32 %v477, 7
  %v479 = vsub.s32 1, %v478
  %v480 = vrot.slane %v300, %v479
  %v481 = vmul.f32 %v475, %v480
  %v482 = vadd.f32 %v472, %v481
  %483 = vset.pattern.permute.xlu0 18
  %484 = vperm.xlu0 %483, %v302
  %v485 = vpop.permute.xlu0 %484
  %v487 = vlaneseq
  %v488 = vshrl.u32 %v487, 7
  %v489 = vsub.s32 2, %v488
  %v490 = vrot.slane %v300, %v489
  %v491 = vmul.f32 %v485, %v490
  %v492 = vadd.f32 %v482, %v491
  %493 = vset.pattern.permute.xlu0 19
  %494 = vperm.xlu0 %493, %v302
  %v495 = vpop.permute.xlu0 %494
  %v497 = vlaneseq
  %v498 = vshrl.u32 %v497, 7
  %v499 = vsub.s32 3, %v498
  %v500 = vrot.slane %v300, %v499
  %v501 = vmul.f32 %v495, %v500
  %v502 = vadd.f32 %v492, %v501
  %503 = vset.pattern.permute.xlu0 20
  %504 = vperm.xlu0 %503, %v302
  %v505 = vpop.permute.xlu0 %504
  %v507 = vlaneseq
  %v508 = vshrl.u32 %v507, 7
  %v509 = vsub.s32 4, %v508
  %v510 = vrot.slane %v300, %v509
  %v511 = vmul.f32 %v505, %v510
  %v512 = vadd.f32 %v502, %v511
  %513 = vset.pattern.permute.xlu0 21
  %514 = vperm.xlu0 %513, %v302
  %v515 = vpop.permute.xlu0 %514
  %v517 = vlaneseq
  %v518 = vshrl.u32 %v517, 7
  %v519 = vsub.s32 5, %v518
  %v520 = vrot.slane %v300, %v519
  %v521 = vmul.f32 %v515, %v520
  %v522 = vadd.f32 %v512, %v521
  %523 = vset.pattern.permute.xlu0 22
  %524 = vperm.xlu0 %523, %v302
  %v525 = vpop.permute.xlu0 %524
  %v527 = vlaneseq
  %v528 = vshrl.u32 %v527, 7
  %v529 = vsub.s32 6, %v528
  %v530 = vrot.slane %v300, %v529
  %v531 = vmul.f32 %v525, %v530
  %v532 = vadd.f32 %v522, %v531
  %533 = vset.pattern.permute.xlu0 23
  %534 = vperm.xlu0 %533, %v302
  %v535 = vpop.permute.xlu0 %534
  %v537 = vlaneseq
  %v538 = vshrl.u32 %v537, 7
  %v539 = vsub.s32 7, %v538
  %v540 = vrot.slane %v300, %v539
  %v541 = vmul.f32 %v535, %v540
  %v542 = vadd.f32 %v532, %v541
  %543 = vset.pattern.permute.xlu0 24
  %544 = vperm.xlu0 %543, %v302
  %v545 = vpop.permute.xlu0 %544
  %v547 = vlaneseq
  %v548 = vshrl.u32 %v547, 7
  %v549 = vsub.s32 0, %v548
  %v550 = vrot.slane %v301, %v549
  %v551 = vmul.f32 %v545, %v550
  %v552 = vadd.f32 %v542, %v551
  %553 = vset.pattern.permute.xlu0 25
  %554 = vperm.xlu0 %553, %v302
  %v555 = vpop.permute.xlu0 %554
  %v557 = vlaneseq
  %v558 = vshrl.u32 %v557, 7
  %v559 = vsub.s32 1, %v558
  %v560 = vrot.slane %v301, %v559
  %v561 = vmul.f32 %v555, %v560
  %v562 = vadd.f32 %v552, %v561
  %563 = vset.pattern.permute.xlu0 26
  %564 = vperm.xlu0 %563, %v302
  %v565 = vpop.permute.xlu0 %564
  %v567 = vlaneseq
  %v568 = vshrl.u32 %v567, 7
  %v569 = vsub.s32 2, %v568
  %v570 = vrot.slane %v301, %v569
  %v571 = vmul.f32 %v565, %v570
  %v572 = vadd.f32 %v562, %v571
  %573 = vset.pattern.permute.xlu0 27
  %574 = vperm.xlu0 %573, %v302
  %v575 = vpop.permute.xlu0 %574
  %v577 = vlaneseq
  %v578 = vshrl.u32 %v577, 7
  %v579 = vsub.s32 3, %v578
  %v580 = vrot.slane %v301, %v579
  %v581 = vmul.f32 %v575, %v580
  %v582 = vadd.f32 %v572, %v581
  %583 = vset.pattern.permute.xlu0 28
  %584 = vperm.xlu0 %583, %v302
  %v585 = vpop.permute.xlu0 %584
  %v587 = vlaneseq
  %v588 = vshrl.u32 %v587, 7
  %v589 = vsub.s32 4, %v588
  %v590 = vrot.slane %v301, %v589
  %v591 = vmul.f32 %v585, %v590
  %v592 = vadd.f32 %v582, %v591
  %593 = vset.pattern.permute.xlu0 29
  %594 = vperm.xlu0 %593, %v302
  %v595 = vpop.permute.xlu0 %594
  %v597 = vlaneseq
  %v598 = vshrl.u32 %v597, 7
  %v599 = vsub.s32 5, %v598
  %v600 = vrot.slane %v301, %v599
  %v601 = vmul.f32 %v595, %v600
  %v602 = vadd.f32 %v592, %v601
  %603 = vset.pattern.permute.xlu0 30
  %604 = vperm.xlu0 %603, %v302
  %v605 = vpop.permute.xlu0 %604
  %v607 = vlaneseq
  %v608 = vshrl.u32 %v607, 7
  %v609 = vsub.s32 6, %v608
  %v610 = vrot.slane %v301, %v609
  %v611 = vmul.f32 %v605, %v610
  %v612 = vadd.f32 %v602, %v611
  %613 = vset.pattern.permute.xlu0 31
  %614 = vperm.xlu0 %613, %v302
  %v615 = vpop.permute.xlu0 %614
  %v617 = vlaneseq
  %v618 = vshrl.u32 %v617, 7
  %v619 = vsub.s32 7, %v618
  %v620 = vrot.slane %v301, %v619
  %v621 = vmul.f32 %v615, %v620
  %v622 = vadd.f32 %v612, %v621
  %vm623 = vcmask 9216
  %624 = vst.msk [vmem:[%s6] sm:$0x3] %vm623, %v622
  // Predicated region
  $region26: #{base_nn_forward.1} parent=0 // pred_check
    _
  $region27: #{base_nn_forward.1} parent=0 // pred_check_branch
    %626 = sbr.rel (0) target = $region29
  $region28: #{base_nn_forward.1} parent=0 // pred_region
    _
  $region29: #{base_nn_forward.1} parent=0 // pred_fallthru
    _
  // Predicated region
  $region30: #{base_nn_forward.1} parent=0 // pred_check
    _
  $region31: #{base_nn_forward.1} parent=0 // pred_check_branch
    %628 = sbr.rel (0) target = $region33
  $region32: #{base_nn_forward.1} parent=0 // pred_region
    _
  $region33: #{base_nn_forward.1} parent=0 // pred_fallthru
    _

</llo_original>
